<compile_context>
chip_gen: v7x
topology: tpu7x:2x2x1
jax: 0.10.0
libtpu: 0.0.40
codegen_flags: <defaults>
</compile_context>

<pallas_src>
import functools

import jax
import jax.numpy as jnp
from jax.experimental import pallas as pl
from jax.experimental.pallas import tpu as pltpu

# ---- model hyper-parameters (small, consistent with the module) --------------
HIDDEN = 32        # transformer hidden size
NUM_LABELS = 1     # regression output
BATCH = 2
MAX_LEN = 8        # padded sequence length
TOK_PER_EX = 3     # number of token indices selected per example
VOCAB = 50
VOCAB_PAD = ((VOCAB + 7) // 8) * 8   # 8-aligned contraction dim for the one-hot matmul


# ---- fused forward kernel ----------------------------------------------------
def _fused_kernel(*refs, batch, tok_per_ex, max_len, vocab_pad, num_labels, with_loss):
    if with_loss:
        (ids_ref, mask_ref, tok_ref,                    # SMEM (scalar prefetch, 1D)
         embwd_ref, bd_ref, wc_ref, bc_ref, labels_ref,  # VMEM inputs
         out_ref) = refs                                 # VMEM output (L, n+1)
    else:
        (ids_ref, mask_ref, tok_ref,
         embwd_ref, bd_ref, wc_ref, bc_ref,
         out_ref) = refs                                 # VMEM output (L, n)

    n = batch * tok_per_ex
    w = n + 1 if with_loss else n    # one extra lane carries the packed MSE loss

    # ---- gather-as-matmul -----------------------------------------------------
    # Build a masked one-hot (VOCAB_PAD, w): tokens on the LANE axis, vocab on
    # sublanes.  onehot[wp_r, r] = mask_r.  A handful of VPU compares replaces
    # the old serialized sld -> dynamic vld -> masked vst chains; the extra
    # (loss) lane, if present, stays all-zero.
    vocab_iota = jax.lax.broadcasted_iota(jnp.int32, (vocab_pad, w), 0)
    slot_iota = jax.lax.broadcasted_iota(jnp.int32, (vocab_pad, w), 1)
    onehot_t = jnp.zeros((vocab_pad, w), jnp.float32)
    for r in range(n):                       # static unroll, n == 6
        b = r // tok_per_ex
        t = tok_ref[r]                       # sequence position   (SMEM scalar)
        wp = ids_ref[b * max_len + t]        # wordpiece id        (SMEM scalar)
        m = mask_ref[b * max_len + t].astype(jnp.float32)
        onehot_t = jnp.where((slot_iota == r) & (vocab_iota == wp), m, onehot_t)

    # dropout(identity) -> dense (pre-fused emb @ W_dense) + bias -> relu.
    # Everything runs transposed so the token axis stays on lanes through to
    # the lane-dense output row.
    x_t = jnp.dot(embwd_ref[...], onehot_t, preferred_element_type=jnp.float32)  # (H, w)
    h_t = jnp.maximum(x_t + bd_ref[...], 0.0)                                    # (H, w)

    # classifier: (L, H) @ (H, w) -> lane-dense (L, w) logits row
    logits_t = jnp.dot(wc_ref[...], h_t, preferred_element_type=jnp.float32) + bc_ref[...]

    if with_loss:
        # MSE over the first n lanes; pack the scalar loss into lane n of the
        # same output row (single unmasked store path, one output DMA).
        lane = jax.lax.broadcasted_iota(jnp.int32, (num_labels, w), 1)
        d = jnp.where(lane < n, logits_t - labels_ref[...], 0.0)
        loss = jnp.sum(d * d, axis=-1, keepdims=True) * (1.0 / (n * num_labels))  # (1, 1)
        out_ref[...] = jnp.where(lane == n, loss, logits_t)
    else:
        out_ref[...] = logits_t


def _build_call(batch, tok_per_ex, max_len, with_loss):
    # The packed-loss lane and the loss normalization assume one regression label.
    assert NUM_LABELS == 1, "fused kernel assumes NUM_LABELS == 1"
    n = batch * tok_per_ex
    w = n + 1 if with_loss else n

    def full(shape):
        # whole-array block; index_map also receives the 3 prefetch refs
        return pl.BlockSpec(shape, lambda i, *_: (0,) * len(shape))

    in_specs = [
        full((HIDDEN, VOCAB_PAD)),        # pre-fused (emb @ W_dense)^T, zero-padded vocab
        full((HIDDEN, 1)),                # dense bias column
        full((NUM_LABELS, HIDDEN)),       # classifier weight (L, H)
        full((NUM_LABELS, 1)),            # classifier bias
    ]
    if with_loss:
        in_specs.append(full((NUM_LABELS, w)))    # lane-dense labels (+ 1 pad lane)

    grid_spec = pltpu.PrefetchScalarGridSpec(
        num_scalar_prefetch=3,            # ids, mask, tokens (flattened 1D) -> SMEM
        grid=(1,),
        in_specs=in_specs,
        out_specs=full((NUM_LABELS, w)),
        scratch_shapes=[],
    )
    kernel = functools.partial(
        _fused_kernel, batch=batch, tok_per_ex=tok_per_ex, max_len=max_len,
        vocab_pad=VOCAB_PAD, num_labels=NUM_LABELS, with_loss=with_loss,
    )
    return pl.pallas_call(
        kernel,
        out_shape=jax.ShapeDtypeStruct((NUM_LABELS, w), jnp.float32),
        grid_spec=grid_spec,
    )


# ---- one-time parameter preparation (eval-mode fusion, cached with params) ---
def prepare_fused_params(params):
    emb = params["embedding"].astype(jnp.float32)
    wd = params["w_dense"].astype(jnp.float32)
    emb_wd_t = (emb @ wd).T                                     # (H, VOCAB)
    emb_wd_t = jnp.pad(emb_wd_t, ((0, 0), (0, VOCAB_PAD - VOCAB)))
    return {
        "embwd_t": emb_wd_t,                                               # (H, VOCAB_PAD)
        "bd_col": params["b_dense"].reshape(HIDDEN, 1).astype(jnp.float32),
        "wc_row": params["w_cls"].T.reshape(NUM_LABELS, HIDDEN).astype(jnp.float32),
        "bc_col": params["b_cls"].reshape(NUM_LABELS, 1).astype(jnp.float32),
    }


# ---- full forward (all hot work in a single Pallas kernel) -------------------
@jax.jit
def transformer_regression_forward(fused_params, input_ids, input_mask, tokens, labels=None):
    batch, tok_per_ex = tokens.shape
    max_len = input_ids.shape[1]
    n = batch * tok_per_ex

    # flattened 1D scalar-prefetch arrays (cheap SMEM footprint)
    ids = input_ids.reshape(-1).astype(jnp.int32)
    msk = input_mask.reshape(-1).astype(jnp.int32)
    tok = tokens.reshape(-1).astype(jnp.int32)

    # TODO(synk): the pretrained AutoModel backbone is not reproduced; a
    # deterministic synthetic embedding table (masked by input_mask) stands in
    # for transformer(input_ids, attention_mask=input_mask)[0].
    embwd_t = fused_params["embwd_t"]
    bd = fused_params["bd_col"]
    wc = fused_params["wc_row"]
    bc = fused_params["bc_col"]

    if labels is None:
        call = _build_call(batch, tok_per_ex, max_len, with_loss=False)
        out = call(ids, msk, tok, embwd_t, bd, wc, bc)        # (L, n) lane-dense
        return (out.T,)                                       # (n, L) — layout plumbing only

    labels_t = labels.reshape(n, NUM_LABELS).T                # (L, n) lane-dense
    labels_t = jnp.pad(labels_t, ((0, 0), (0, 1)))            # pad lane is masked in-kernel
    call = _build_call(batch, tok_per_ex, max_len, with_loss=True)
    out = call(ids, msk, tok, embwd_t, bd, wc, bc, labels_t)  # (L, n+1)
    logits = out[:, :n].T                                     # (n, L)
    loss = out[0, n]                                          # packed scalar MSE
    return (loss, logits)


# ---- pure-JAX reference (for a correctness sanity check) ---------------------
def _reference_forward(params, input_ids, input_mask, tokens, labels):
    hs = params["embedding"][input_ids] * input_mask[..., None].astype(jnp.float32)
    gathered = jnp.take_along_axis(hs, tokens[..., None].astype(jnp.int32), axis=1)
    x = gathered.reshape(-1, HIDDEN)
    h = jnp.maximum(x @ params["w_dense"] + params["b_dense"], 0.0)
    logits = h @ params["w_cls"] + params["b_cls"]
    loss = jnp.mean((logits - labels.reshape(logits.shape)) ** 2)
    return loss, logits


def init_params(key):
    k_emb, k_wd, k_bd, k_wc, k_bc = jax.random.split(key, 5)
    scale = 1.0 / jnp.sqrt(HIDDEN)
    return {
        "embedding": jax.random.normal(k_emb, (VOCAB, HIDDEN), jnp.float32) * 0.02,
        "w_dense": jax.random.uniform(k_wd, (HIDDEN, HIDDEN), jnp.float32, -scale, scale),
        "b_dense": jax.random.uniform(k_bd, (HIDDEN,), jnp.float32, -scale, scale),
        "w_cls": jax.random.uniform(k_wc, (HIDDEN, NUM_LABELS), jnp.float32, -scale, scale),
        "b_cls": jax.random.uniform(k_bc, (NUM_LABELS,), jnp.float32, -scale, scale),
    }


if __name__ == "__main__":
    key = jax.random.PRNGKey(0)
    k_params, k_ids, k_tok, k_lab = jax.random.split(key, 4)

    params = init_params(k_params)
    fused_params = prepare_fused_params(params)

    input_ids = jax.random.randint(k_ids, (BATCH, MAX_LEN), 0, VOCAB, jnp.int32)
    # simulate padding: last two positions of every sequence are masked out
    input_mask = jnp.ones((BATCH, MAX_LEN), jnp.int32).at[:, MAX_LEN - 2:].set(0)
    tokens = jax.random.randint(k_tok, (BATCH, TOK_PER_EX), 0, MAX_LEN, jnp.int32)
    labels = jax.random.normal(k_lab, (BATCH * TOK_PER_EX, NUM_LABELS), jnp.float32)

    loss, logits = transformer_regression_forward(
        fused_params, input_ids, input_mask, tokens, labels=labels
    )
    (logits_only,) = transformer_regression_forward(
        fused_params, input_ids, input_mask, tokens
    )
    jax.block_until_ready((loss, logits, logits_only))

    assert logits.shape == (BATCH * TOK_PER_EX, NUM_LABELS)
    assert loss.shape == ()

    ref_loss, ref_logits = _reference_forward(params, input_ids, input_mask, tokens, labels)
    assert jnp.allclose(logits, ref_logits, rtol=5e-2, atol=5e-3)
    assert jnp.allclose(logits_only, ref_logits, rtol=5e-2, atol=5e-3)
    assert jnp.allclose(loss, ref_loss, rtol=5e-2, atol=5e-3)

    print("KERNEL_OK")
</pallas_src>

<mosaic_0001>
module attributes {stable_mosaic.version = 11 : i64} {
  func.func @_fused_kernel(%arg0: i32, %arg1: memref<16xi32, #tpu.memory_space<smem>>, %arg2: memref<16xi32, #tpu.memory_space<smem>>, %arg3: memref<6xi32, #tpu.memory_space<smem>>, %arg4: memref<32x56xf32, #tpu.memory_space<vmem>>, %arg5: memref<32x1xf32, #tpu.memory_space<vmem>>, %arg6: memref<1x32xf32, #tpu.memory_space<vmem>>, %arg7: memref<1x1xf32, #tpu.memory_space<vmem>>, %arg8: memref<1x7xf32, #tpu.memory_space<vmem>>, %arg9: memref<1x7xf32, #tpu.memory_space<vmem>>) attributes {dimension_semantics = [#tpu.dimension_semantics<arbitrary>], iteration_bounds = array<i64: 1>, scalar_prefetch = 3 : i64, scratch_operands = 0 : i64, tpu.core_type = #tpu.core_type<tc>, window_params = [{pipeline_mode = #tpu.pipeline_mode<synchronous>, transform_indices = @transform_0, window_bounds = array<i64: 32, 56>}, {pipeline_mode = #tpu.pipeline_mode<synchronous>, transform_indices = @transform_1, window_bounds = array<i64: 32, 1>}, {pipeline_mode = #tpu.pipeline_mode<synchronous>, transform_indices = @transform_2, window_bounds = array<i64: 1, 32>}, {pipeline_mode = #tpu.pipeline_mode<synchronous>, transform_indices = @transform_3, window_bounds = array<i64: 1, 1>}, {pipeline_mode = #tpu.pipeline_mode<synchronous>, transform_indices = @transform_4, window_bounds = array<i64: 1, 7>}, {pipeline_mode = #tpu.pipeline_mode<synchronous>, transform_indices = @transform_5, window_bounds = array<i64: 1, 7>}]} {
    %0 = tpu.iota {dimensions = array<i32: 0>} : vector<56x7xi32>
    %1 = tpu.iota {dimensions = array<i32: 1>} : vector<56x7xi32>
    %cst = arith.constant 0.000000e+00 : f32
    %2 = vector.broadcast %cst : f32 to vector<56x7xf32>
    %c0 = arith.constant 0 : index
    %3 = memref.load %arg3[%c0] : memref<6xi32, #tpu.memory_space<smem>>
    %c0_i32 = arith.constant 0 : i32
    %4 = arith.addi %c0_i32, %3 : i32
    %5 = arith.index_cast %4 : i32 to index
    %6 = memref.load %arg1[%5] : memref<16xi32, #tpu.memory_space<smem>>
    %c0_i32_0 = arith.constant 0 : i32
    %7 = arith.addi %c0_i32_0, %3 : i32
    %8 = arith.index_cast %7 : i32 to index
    %9 = memref.load %arg2[%8] : memref<16xi32, #tpu.memory_space<smem>>
    %10 = arith.sitofp %9 : i32 to f32
    %c0_i32_1 = arith.constant 0 : i32
    %11 = vector.broadcast %c0_i32_1 : i32 to vector<56x7xi32>
    %12 = arith.cmpi eq, %1, %11 : vector<56x7xi32>
    %13 = vector.broadcast %6 : i32 to vector<56x7xi32>
    %14 = arith.cmpi eq, %0, %13 : vector<56x7xi32>
    %15 = arith.andi %12, %14 : vector<56x7xi1>
    %16 = vector.broadcast %10 : f32 to vector<56x7xf32>
    %17 = arith.select %15, %16, %2 : vector<56x7xi1>, vector<56x7xf32>
    %c1 = arith.constant 1 : index
    %18 = memref.load %arg3[%c1] : memref<6xi32, #tpu.memory_space<smem>>
    %c0_i32_2 = arith.constant 0 : i32
    %19 = arith.addi %c0_i32_2, %18 : i32
    %20 = arith.index_cast %19 : i32 to index
    %21 = memref.load %arg1[%20] : memref<16xi32, #tpu.memory_space<smem>>
    %c0_i32_3 = arith.constant 0 : i32
    %22 = arith.addi %c0_i32_3, %18 : i32
    %23 = arith.index_cast %22 : i32 to index
    %24 = memref.load %arg2[%23] : memref<16xi32, #tpu.memory_space<smem>>
    %25 = arith.sitofp %24 : i32 to f32
    %c1_i32 = arith.constant 1 : i32
    %26 = vector.broadcast %c1_i32 : i32 to vector<56x7xi32>
    %27 = arith.cmpi eq, %1, %26 : vector<56x7xi32>
    %28 = vector.broadcast %21 : i32 to vector<56x7xi32>
    %29 = arith.cmpi eq, %0, %28 : vector<56x7xi32>
    %30 = arith.andi %27, %29 : vector<56x7xi1>
    %31 = vector.broadcast %25 : f32 to vector<56x7xf32>
    %32 = arith.select %30, %31, %17 : vector<56x7xi1>, vector<56x7xf32>
    %c2 = arith.constant 2 : index
    %33 = memref.load %arg3[%c2] : memref<6xi32, #tpu.memory_space<smem>>
    %c0_i32_4 = arith.constant 0 : i32
    %34 = arith.addi %c0_i32_4, %33 : i32
    %35 = arith.index_cast %34 : i32 to index
    %36 = memref.load %arg1[%35] : memref<16xi32, #tpu.memory_space<smem>>
    %c0_i32_5 = arith.constant 0 : i32
    %37 = arith.addi %c0_i32_5, %33 : i32
    %38 = arith.index_cast %37 : i32 to index
    %39 = memref.load %arg2[%38] : memref<16xi32, #tpu.memory_space<smem>>
    %40 = arith.sitofp %39 : i32 to f32
    %c2_i32 = arith.constant 2 : i32
    %41 = vector.broadcast %c2_i32 : i32 to vector<56x7xi32>
    %42 = arith.cmpi eq, %1, %41 : vector<56x7xi32>
    %43 = vector.broadcast %36 : i32 to vector<56x7xi32>
    %44 = arith.cmpi eq, %0, %43 : vector<56x7xi32>
    %45 = arith.andi %42, %44 : vector<56x7xi1>
    %46 = vector.broadcast %40 : f32 to vector<56x7xf32>
    %47 = arith.select %45, %46, %32 : vector<56x7xi1>, vector<56x7xf32>
    %c3 = arith.constant 3 : index
    %48 = memref.load %arg3[%c3] : memref<6xi32, #tpu.memory_space<smem>>
    %c8_i32 = arith.constant 8 : i32
    %49 = arith.addi %c8_i32, %48 : i32
    %50 = arith.index_cast %49 : i32 to index
    %51 = memref.load %arg1[%50] : memref<16xi32, #tpu.memory_space<smem>>
    %c8_i32_6 = arith.constant 8 : i32
    %52 = arith.addi %c8_i32_6, %48 : i32
    %53 = arith.index_cast %52 : i32 to index
    %54 = memref.load %arg2[%53] : memref<16xi32, #tpu.memory_space<smem>>
    %55 = arith.sitofp %54 : i32 to f32
    %c3_i32 = arith.constant 3 : i32
    %56 = vector.broadcast %c3_i32 : i32 to vector<56x7xi32>
    %57 = arith.cmpi eq, %1, %56 : vector<56x7xi32>
    %58 = vector.broadcast %51 : i32 to vector<56x7xi32>
    %59 = arith.cmpi eq, %0, %58 : vector<56x7xi32>
    %60 = arith.andi %57, %59 : vector<56x7xi1>
    %61 = vector.broadcast %55 : f32 to vector<56x7xf32>
    %62 = arith.select %60, %61, %47 : vector<56x7xi1>, vector<56x7xf32>
    %c4 = arith.constant 4 : index
    %63 = memref.load %arg3[%c4] : memref<6xi32, #tpu.memory_space<smem>>
    %c8_i32_7 = arith.constant 8 : i32
    %64 = arith.addi %c8_i32_7, %63 : i32
    %65 = arith.index_cast %64 : i32 to index
    %66 = memref.load %arg1[%65] : memref<16xi32, #tpu.memory_space<smem>>
    %c8_i32_8 = arith.constant 8 : i32
    %67 = arith.addi %c8_i32_8, %63 : i32
    %68 = arith.index_cast %67 : i32 to index
    %69 = memref.load %arg2[%68] : memref<16xi32, #tpu.memory_space<smem>>
    %70 = arith.sitofp %69 : i32 to f32
    %c4_i32 = arith.constant 4 : i32
    %71 = vector.broadcast %c4_i32 : i32 to vector<56x7xi32>
    %72 = arith.cmpi eq, %1, %71 : vector<56x7xi32>
    %73 = vector.broadcast %66 : i32 to vector<56x7xi32>
    %74 = arith.cmpi eq, %0, %73 : vector<56x7xi32>
    %75 = arith.andi %72, %74 : vector<56x7xi1>
    %76 = vector.broadcast %70 : f32 to vector<56x7xf32>
    %77 = arith.select %75, %76, %62 : vector<56x7xi1>, vector<56x7xf32>
    %c5 = arith.constant 5 : index
    %78 = memref.load %arg3[%c5] : memref<6xi32, #tpu.memory_space<smem>>
    %c8_i32_9 = arith.constant 8 : i32
    %79 = arith.addi %c8_i32_9, %78 : i32
    %80 = arith.index_cast %79 : i32 to index
    %81 = memref.load %arg1[%80] : memref<16xi32, #tpu.memory_space<smem>>
    %c8_i32_10 = arith.constant 8 : i32
    %82 = arith.addi %c8_i32_10, %78 : i32
    %83 = arith.index_cast %82 : i32 to index
    %84 = memref.load %arg2[%83] : memref<16xi32, #tpu.memory_space<smem>>
    %85 = arith.sitofp %84 : i32 to f32
    %c5_i32 = arith.constant 5 : i32
    %86 = vector.broadcast %c5_i32 : i32 to vector<56x7xi32>
    %87 = arith.cmpi eq, %1, %86 : vector<56x7xi32>
    %88 = vector.broadcast %81 : i32 to vector<56x7xi32>
    %89 = arith.cmpi eq, %0, %88 : vector<56x7xi32>
    %90 = arith.andi %87, %89 : vector<56x7xi1>
    %91 = vector.broadcast %85 : f32 to vector<56x7xf32>
    %92 = arith.select %90, %91, %77 : vector<56x7xi1>, vector<56x7xf32>
    %c0_11 = arith.constant 0 : index
    %c0_12 = arith.constant 0 : index
    %93 = vector.load %arg4[%c0_11, %c0_12] : memref<32x56xf32, #tpu.memory_space<vmem>>, vector<32x56xf32>
    %cst_13 = arith.constant dense<0.000000e+00> : vector<32x7xf32>
    %94 = tpu.matmul %93, %92, %cst_13 {dimension_numbers = #tpu.dot_dimension_numbers<[1], [0], [0], [1], [0, 0, 1, 1], [], []>} : vector<32x56xf32>, vector<56x7xf32>, vector<32x7xf32> -> vector<32x7xf32>
    %c0_14 = arith.constant 0 : index
    %c0_15 = arith.constant 0 : index
    %95 = vector.load %arg5[%c0_14, %c0_15] : memref<32x1xf32, #tpu.memory_space<vmem>>, vector<32x1xf32>
    %96 = vector.broadcast %95 : vector<32x1xf32> to vector<32x7xf32>
    %97 = arith.addf %94, %96 : vector<32x7xf32>
    %cst_16 = arith.constant 0.000000e+00 : f32
    %98 = vector.broadcast %cst_16 : f32 to vector<32x7xf32>
    %99 = arith.maximumf %97, %98 : vector<32x7xf32>
    %c0_17 = arith.constant 0 : index
    %c0_18 = arith.constant 0 : index
    %100 = vector.load %arg6[%c0_17, %c0_18] : memref<1x32xf32, #tpu.memory_space<vmem>>, vector<1x32xf32>
    %cst_19 = arith.constant dense<0.000000e+00> : vector<1x7xf32>
    %101 = tpu.matmul %100, %99, %cst_19 {dimension_numbers = #tpu.dot_dimension_numbers<[1], [0], [0], [1], [0, 0, 1, 1], [], []>} : vector<1x32xf32>, vector<32x7xf32>, vector<1x7xf32> -> vector<1x7xf32>
    %c0_20 = arith.constant 0 : index
    %c0_21 = arith.constant 0 : index
    %102 = vector.load %arg7[%c0_20, %c0_21] : memref<1x1xf32, #tpu.memory_space<vmem>>, vector<1x1xf32>
    %103 = vector.broadcast %102 : vector<1x1xf32> to vector<1x7xf32>
    %104 = arith.addf %101, %103 : vector<1x7xf32>
    %105 = tpu.iota {dimensions = array<i32: 1>} : vector<1x7xi32>
    %c6_i32 = arith.constant 6 : i32
    %106 = vector.broadcast %c6_i32 : i32 to vector<1x7xi32>
    %107 = arith.cmpi slt, %105, %106 : vector<1x7xi32>
    %c0_22 = arith.constant 0 : index
    %c0_23 = arith.constant 0 : index
    %108 = vector.load %arg8[%c0_22, %c0_23] : memref<1x7xf32, #tpu.memory_space<vmem>>, vector<1x7xf32>
    %109 = arith.subf %104, %108 : vector<1x7xf32>
    %cst_24 = arith.constant 0.000000e+00 : f32
    %110 = vector.broadcast %cst_24 : f32 to vector<1x7xf32>
    %111 = arith.select %107, %109, %110 : vector<1x7xi1>, vector<1x7xf32>
    %112 = arith.mulf %111, %111 : vector<1x7xf32>
    %cst_25 = arith.constant dense<0.000000e+00> : vector<1xf32>
    %113 = vector.multi_reduction <add>, %112, %cst_25 [1] : vector<1x7xf32> to vector<1xf32>
    %114 = vector.shape_cast %113 : vector<1xf32> to vector<1x1xf32>
    %cst_26 = arith.constant 0.166666672 : f32
    %115 = vector.broadcast %cst_26 : f32 to vector<1x1xf32>
    %116 = arith.mulf %114, %115 : vector<1x1xf32>
    %c6_i32_27 = arith.constant 6 : i32
    %117 = vector.broadcast %c6_i32_27 : i32 to vector<1x7xi32>
    %118 = arith.cmpi eq, %105, %117 : vector<1x7xi32>
    %119 = vector.shape_cast %116 : vector<1x1xf32> to vector<1x1xf32>
    %120 = vector.broadcast %119 : vector<1x1xf32> to vector<1x7xf32>
    %121 = arith.select %118, %120, %104 : vector<1x7xi1>, vector<1x7xf32>
    %c0_28 = arith.constant 0 : index
    %c0_29 = arith.constant 0 : index
    %122 = vector.load %arg9[%c0_28, %c0_29] : memref<1x7xf32, #tpu.memory_space<vmem>>, vector<1x7xf32>
    tpu.vector_store %arg9[%c0_28, %c0_29], %121 {strides = array<i32>} : memref<1x7xf32, #tpu.memory_space<vmem>>, vector<1x7xf32>,
    return
  }
  func.func @transform_0(%arg0: i32, %arg1: memref<16xi32, #tpu.memory_space<smem>>, %arg2: memref<16xi32, #tpu.memory_space<smem>>, %arg3: memref<6xi32, #tpu.memory_space<smem>>) -> (i32, i32) {
    %c0_i32 = arith.constant 0 : i32
    %c0_i32_0 = arith.constant 0 : i32
    %c0_i32_1 = arith.constant 0 : i32
    return %c0_i32, %c0_i32_0 : i32, i32
  }
  func.func @transform_1(%arg0: i32, %arg1: memref<16xi32, #tpu.memory_space<smem>>, %arg2: memref<16xi32, #tpu.memory_space<smem>>, %arg3: memref<6xi32, #tpu.memory_space<smem>>) -> (i32, i32) {
    %c0_i32 = arith.constant 0 : i32
    %c0_i32_0 = arith.constant 0 : i32
    %c0_i32_1 = arith.constant 0 : i32
    return %c0_i32, %c0_i32_0 : i32, i32
  }
  func.func @transform_2(%arg0: i32, %arg1: memref<16xi32, #tpu.memory_space<smem>>, %arg2: memref<16xi32, #tpu.memory_space<smem>>, %arg3: memref<6xi32, #tpu.memory_space<smem>>) -> (i32, i32) {
    %c0_i32 = arith.constant 0 : i32
    %c0_i32_0 = arith.constant 0 : i32
    %c0_i32_1 = arith.constant 0 : i32
    return %c0_i32, %c0_i32_0 : i32, i32
  }
  func.func @transform_3(%arg0: i32, %arg1: memref<16xi32, #tpu.memory_space<smem>>, %arg2: memref<16xi32, #tpu.memory_space<smem>>, %arg3: memref<6xi32, #tpu.memory_space<smem>>) -> (i32, i32) {
    %c0_i32 = arith.constant 0 : i32
    %c0_i32_0 = arith.constant 0 : i32
    %c0_i32_1 = arith.constant 0 : i32
    return %c0_i32, %c0_i32_0 : i32, i32
  }
  func.func @transform_4(%arg0: i32, %arg1: memref<16xi32, #tpu.memory_space<smem>>, %arg2: memref<16xi32, #tpu.memory_space<smem>>, %arg3: memref<6xi32, #tpu.memory_space<smem>>) -> (i32, i32) {
    %c0_i32 = arith.constant 0 : i32
    %c0_i32_0 = arith.constant 0 : i32
    %c0_i32_1 = arith.constant 0 : i32
    return %c0_i32, %c0_i32_0 : i32, i32
  }
  func.func @transform_5(%arg0: i32, %arg1: memref<16xi32, #tpu.memory_space<smem>>, %arg2: memref<16xi32, #tpu.memory_space<smem>>, %arg3: memref<6xi32, #tpu.memory_space<smem>>) -> (i32, i32) {
    %c0_i32 = arith.constant 0 : i32
    %c0_i32_0 = arith.constant 0 : i32
    %c0_i32_1 = arith.constant 0 : i32
    return %c0_i32, %c0_i32_0 : i32, i32
  }
}

</mosaic_0001>

<llo_original>
// kernel: transformer_regression_forward.1
$region0: #{transformer_regression_forward.1}
  #allocation0 [shape = 'u32[]', space=smem, size = 0x4, offset = 0x4, fixed_abs, tag = 'smem constant byte address 0x4 - core index']
  #allocation1 [shape = 'u32[144,128]{1,0:T(1,128)}', space=vmem, size = 0x12000, scoped, tag = 'internal scratch']
  #allocation2 [shape = 's32[1]{0}', space=sflag, size = 0x4, scoped, tag = 'scoped memory for transformer_regression_forward.1']
  #allocation3 [shape = 'u8[512]{0}', space=smem, size = 0x200, scoped, tag = 'prefetched SMEM operand 0']
  #allocation4 [shape = 'u8[512]{0}', space=smem, size = 0x200, scoped, tag = 'prefetched SMEM operand 1']
  #allocation5 [shape = 'u8[512]{0}', space=smem, size = 0x200, scoped, tag = 'prefetched SMEM operand 2']
  #allocation6 [shape = 'f32[1,1]{1,0:T(1,128)S(1)}', space=vmem, size = 0x200, scoped, tag = 'scoped memory for transformer_regression_forward.1']
  %s0 = inlined_call_operand.vmem [shape: s32[16], index: 0, kind: input, shape index: {}]
  %s1 = inlined_call_operand.vmem [shape: s32[16], index: 1, kind: input, shape index: {}]
  %s2 = inlined_call_operand.vmem [shape: s32[6], index: 2, kind: input, shape index: {}]
  %s3 = inlined_call_operand.vmem [shape: f32[32,56], index: 3, kind: input, shape index: {}]
  %s4 = inlined_call_operand.vmem [shape: f32[32,1], index: 4, kind: input, shape index: {}]
  %s5 = inlined_call_operand.vmem [shape: f32[1,32], index: 5, kind: input, shape index: {}]
  %s6 = inlined_call_operand.<no memory space> [shape: f32[1,1], index: 6, kind: input, shape index: {}]
  %s7 = inlined_call_operand.vmem [shape: f32[1,7], index: 7, kind: input, shape index: {}]
  %s8 = inlined_call_operand.vmem [shape: f32[1,7], index: 8, kind: output, shape index: {}]
  %s9 = sld [smem:[#allocation0]]
  $region30: #{transformer_regression_forward.1} parent=0
    _
  %s11 = ssub.s32 1, %s9
  %s12 = scalar_select 0, %s11, %s9
  %s13 = sshll.u32 %s0, 4
  %s14 = int_to_ptr.vmem [resolvable:$true] %s13
  %16 = dma.vmem_to_smem %s14, 16, [#allocation3], [#allocation2]
  %s17 = sshll.u32 %s1, 4
  %s18 = int_to_ptr.vmem [resolvable:$true] %s17
  %20 = dma.vmem_to_smem %s18, 16, [#allocation4], [#allocation2]
  %s21 = sshll.u32 %s2, 4
  %s22 = int_to_ptr.vmem [resolvable:$true] %s21
  %24 = dma.vmem_to_smem %s22, 16, [#allocation5], [#allocation2]
  %v25 = vstv %s6
  %26 = vst [vmem:[#allocation6] sm:$0x1] %v25
  %27 = dma.done [#allocation2], 48
  %28 = sfence
  // Predicated region
  $region2: #{transformer_regression_forward.1} parent=0 // pred_check
    _
  $region3: #{transformer_regression_forward.1} parent=0 // pred_check_branch
    %30 = sbr.rel (0) target = $region5
  $region4: #{transformer_regression_forward.1} parent=0 // pred_region
    _
  $region5: #{transformer_regression_forward.1} parent=0 // pred_fallthru
    _
  // Predicated region
  $region6: #{transformer_regression_forward.1} parent=0 // pred_check
    _
  $region7: #{transformer_regression_forward.1} parent=0 // pred_check_branch
    %32 = sbr.rel (0) target = $region9
  $region8: #{transformer_regression_forward.1} parent=0 // pred_region
    _
  $region9: #{transformer_regression_forward.1} parent=0 // pred_fallthru
    _
  // Predicated region
  $region10: #{transformer_regression_forward.1} parent=0 // pred_check
    _
  $region11: #{transformer_regression_forward.1} parent=0 // pred_check_branch
    %34 = sbr.rel (0) target = $region13
  $region12: #{transformer_regression_forward.1} parent=0 // pred_region
    _
  $region13: #{transformer_regression_forward.1} parent=0 // pred_fallthru
    _
  // Predicated region
  $region14: #{transformer_regression_forward.1} parent=0 // pred_check
    _
  $region15: #{transformer_regression_forward.1} parent=0 // pred_check_branch
    %36 = sbr.rel (0) target = $region17
  $region16: #{transformer_regression_forward.1} parent=0 // pred_region
    _
  $region17: #{transformer_regression_forward.1} parent=0 // pred_fallthru
    _
  // Predicated region
  $region18: #{transformer_regression_forward.1} parent=0 // pred_check
    _
  $region19: #{transformer_regression_forward.1} parent=0 // pred_check_branch
    %38 = sbr.rel (0) target = $region21
  $region20: #{transformer_regression_forward.1} parent=0 // pred_region
    _
  $region21: #{transformer_regression_forward.1} parent=0 // pred_fallthru
    _
  %v39 = vlaneseq
  %v40 = vshrl.u32 %v39, 7
  %v41 = vadd.s32 %v40, 8
  %v42 = vadd.s32 %v40, 16
  %v43 = vadd.s32 %v40, 24
  %v44 = vadd.s32 %v40, 32
  %v45 = vadd.s32 %v40, 40
  %v46 = vadd.s32 %v40, 48
  %v47 = vlaneseq
  %v48 = vand.u32 %v47, 127
  %s49 = sld [smem:[#allocation5]]
  %s50 = sld [smem:[#allocation3 + %s49]]
  %s51 = sld [smem:[#allocation4 + %s49]]
  %s52 = scvt.s32.f32 %s51
  %vm53 = vcmp.eq.s32.totalorder %v48, 0
  %v54 = vstv %s50
  %vm55 = vcmp.eq.s32.totalorder %v40, %v54
  %vm56 = vcmp.eq.s32.totalorder %v41, %v54
  %vm57 = vcmp.eq.s32.totalorder %v42, %v54
  %vm58 = vcmp.eq.s32.totalorder %v43, %v54
  %vm59 = vcmp.eq.s32.totalorder %v44, %v54
  %vm60 = vcmp.eq.s32.totalorder %v45, %v54
  %vm61 = vcmp.eq.s32.totalorder %v46, %v54
  %vm62 = vmand %vm53, %vm55
  %vm63 = vmand %vm53, %vm56
  %vm64 = vmand %vm53, %vm57
  %vm65 = vmand %vm53, %vm58
  %vm66 = vmand %vm53, %vm59
  %vm67 = vmand %vm53, %vm60
  %vm68 = vmand %vm53, %vm61
  %v69 = vstv %s52
  %v70 = vsel %vm62, %v69, 0.0
  %v71 = vsel %vm63, %v69, 0.0
  %v72 = vsel %vm64, %v69, 0.0
  %v73 = vsel %vm65, %v69, 0.0
  %v74 = vsel %vm66, %v69, 0.0
  %v75 = vsel %vm67, %v69, 0.0
  %v76 = vsel %vm68, %v69, 0.0
  %s77 = sld [smem:[#allocation5 + $0x1]]
  %s78 = sld [smem:[#allocation3 + %s77]]
  %s79 = sld [smem:[#allocation4 + %s77]]
  %s80 = scvt.s32.f32 %s79
  %vm81 = vcmp.eq.s32.totalorder %v48, 1
  %v82 = vstv %s78
  %vm83 = vcmp.eq.s32.totalorder %v40, %v82
  %vm84 = vcmp.eq.s32.totalorder %v41, %v82
  %vm85 = vcmp.eq.s32.totalorder %v42, %v82
  %vm86 = vcmp.eq.s32.totalorder %v43, %v82
  %vm87 = vcmp.eq.s32.totalorder %v44, %v82
  %vm88 = vcmp.eq.s32.totalorder %v45, %v82
  %vm89 = vcmp.eq.s32.totalorder %v46, %v82
  %vm90 = vmand %vm81, %vm83
  %vm91 = vmand %vm81, %vm84
  %vm92 = vmand %vm81, %vm85
  %vm93 = vmand %vm81, %vm86
  %vm94 = vmand %vm81, %vm87
  %vm95 = vmand %vm81, %vm88
  %vm96 = vmand %vm81, %vm89
  %v97 = vstv %s80
  %v98 = vsel %vm90, %v97, %v70
  %v99 = vsel %vm91, %v97, %v71
  %v100 = vsel %vm92, %v97, %v72
  %v101 = vsel %vm93, %v97, %v73
  %v102 = vsel %vm94, %v97, %v74
  %v103 = vsel %vm95, %v97, %v75
  %v104 = vsel %vm96, %v97, %v76
  %s105 = sld [smem:[#allocation5 + $0x2]]
  %s106 = sld [smem:[#allocation3 + %s105]]
  %s107 = sld [smem:[#allocation4 + %s105]]
  %s108 = scvt.s32.f32 %s107
  %vm109 = vcmp.eq.s32.totalorder %v48, 2
  %v110 = vstv %s106
  %vm111 = vcmp.eq.s32.totalorder %v40, %v110
  %vm112 = vcmp.eq.s32.totalorder %v41, %v110
  %vm113 = vcmp.eq.s32.totalorder %v42, %v110
  %vm114 = vcmp.eq.s32.totalorder %v43, %v110
  %vm115 = vcmp.eq.s32.totalorder %v44, %v110
  %vm116 = vcmp.eq.s32.totalorder %v45, %v110
  %vm117 = vcmp.eq.s32.totalorder %v46, %v110
  %vm118 = vmand %vm109, %vm111
  %vm119 = vmand %vm109, %vm112
  %vm120 = vmand %vm109, %vm113
  %vm121 = vmand %vm109, %vm114
  %vm122 = vmand %vm109, %vm115
  %vm123 = vmand %vm109, %vm116
  %vm124 = vmand %vm109, %vm117
  %v125 = vstv %s108
  %v126 = vsel %vm118, %v125, %v98
  %v127 = vsel %vm119, %v125, %v99
  %v128 = vsel %vm120, %v125, %v100
  %v129 = vsel %vm121, %v125, %v101
  %v130 = vsel %vm122, %v125, %v102
  %v131 = vsel %vm123, %v125, %v103
  %v132 = vsel %vm124, %v125, %v104
  %s133 = sld [smem:[#allocation5 + $0x3]]
  %s134 = sadd.s32 %s133, 8
  %s135 = sld [smem:[#allocation3 + %s134]]
  %s136 = sld [smem:[#allocation4 + %s134]]
  %s137 = scvt.s32.f32 %s136
  %vm138 = vcmp.eq.s32.totalorder %v48, 3
  %v139 = vstv %s135
  %vm140 = vcmp.eq.s32.totalorder %v40, %v139
  %vm141 = vcmp.eq.s32.totalorder %v41, %v139
  %vm142 = vcmp.eq.s32.totalorder %v42, %v139
  %vm143 = vcmp.eq.s32.totalorder %v43, %v139
  %vm144 = vcmp.eq.s32.totalorder %v44, %v139
  %vm145 = vcmp.eq.s32.totalorder %v45, %v139
  %vm146 = vcmp.eq.s32.totalorder %v46, %v139
  %vm147 = vmand %vm138, %vm140
  %vm148 = vmand %vm138, %vm141
  %vm149 = vmand %vm138, %vm142
  %vm150 = vmand %vm138, %vm143
  %vm151 = vmand %vm138, %vm144
  %vm152 = vmand %vm138, %vm145
  %vm153 = vmand %vm138, %vm146
  %v154 = vstv %s137
  %v155 = vsel %vm147, %v154, %v126
  %v156 = vsel %vm148, %v154, %v127
  %v157 = vsel %vm149, %v154, %v128
  %v158 = vsel %vm150, %v154, %v129
  %v159 = vsel %vm151, %v154, %v130
  %v160 = vsel %vm152, %v154, %v131
  %v161 = vsel %vm153, %v154, %v132
  %s162 = sld [smem:[#allocation5 + $0x4]]
  %s163 = sadd.s32 %s162, 8
  %s164 = sld [smem:[#allocation3 + %s163]]
  %s165 = sld [smem:[#allocation4 + %s163]]
  %s166 = scvt.s32.f32 %s165
  %vm167 = vcmp.eq.s32.totalorder %v48, 4
  %v168 = vstv %s164
  %vm169 = vcmp.eq.s32.totalorder %v40, %v168
  %vm170 = vcmp.eq.s32.totalorder %v41, %v168
  %vm171 = vcmp.eq.s32.totalorder %v42, %v168
  %vm172 = vcmp.eq.s32.totalorder %v43, %v168
  %vm173 = vcmp.eq.s32.totalorder %v44, %v168
  %vm174 = vcmp.eq.s32.totalorder %v45, %v168
  %vm175 = vcmp.eq.s32.totalorder %v46, %v168
  %vm176 = vmand %vm167, %vm169
  %vm177 = vmand %vm167, %vm170
  %vm178 = vmand %vm167, %vm171
  %vm179 = vmand %vm167, %vm172
  %vm180 = vmand %vm167, %vm173
  %vm181 = vmand %vm167, %vm174
  %vm182 = vmand %vm167, %vm175
  %v183 = vstv %s166
  %v184 = vsel %vm176, %v183, %v155
  %v185 = vsel %vm177, %v183, %v156
  %v186 = vsel %vm178, %v183, %v157
  %v187 = vsel %vm179, %v183, %v158
  %v188 = vsel %vm180, %v183, %v159
  %v189 = vsel %vm181, %v183, %v160
  %v190 = vsel %vm182, %v183, %v161
  %s191 = sld [smem:[#allocation5 + $0x5]]
  %s192 = sadd.s32 %s191, 8
  %s193 = sld [smem:[#allocation3 + %s192]]
  %s194 = sld [smem:[#allocation4 + %s192]]
  %s195 = scvt.s32.f32 %s194
  %vm196 = vcmp.eq.s32.totalorder %v48, 5
  %v197 = vstv %s193
  %vm198 = vcmp.eq.s32.totalorder %v40, %v197
  %vm199 = vcmp.eq.s32.totalorder %v41, %v197
  %vm200 = vcmp.eq.s32.totalorder %v42, %v197
  %vm201 = vcmp.eq.s32.totalorder %v43, %v197
  %vm202 = vcmp.eq.s32.totalorder %v44, %v197
  %vm203 = vcmp.eq.s32.totalorder %v45, %v197
  %vm204 = vcmp.eq.s32.totalorder %v46, %v197
  %vm205 = vmand %vm196, %vm198
  %vm206 = vmand %vm196, %vm199
  %vm207 = vmand %vm196, %vm200
  %vm208 = vmand %vm196, %vm201
  %vm209 = vmand %vm196, %vm202
  %vm210 = vmand %vm196, %vm203
  %vm211 = vmand %vm196, %vm204
  %v212 = vstv %s195
  %v213 = vsel %vm205, %v212, %v184
  %v214 = vsel %vm206, %v212, %v185
  %v215 = vsel %vm207, %v212, %v186
  %v216 = vsel %vm208, %v212, %v187
  %v217 = vsel %vm209, %v212, %v188
  %v218 = vsel %vm210, %v212, %v189
  %v219 = vsel %vm211, %v212, %v190
  %v220 = vld [vmem:[%s3] sm:$0xff]
  %v221 = vld [vmem:[%s3 + $0x8] sm:$0xff]
  %v222 = vld [vmem:[%s3 + $0x10] sm:$0xff]
  %v223 = vld [vmem:[%s3 + $0x18] sm:$0xff]
  %v224 = vld [vmem:[%s4] sm:$0xff]
  %v225 = vld [vmem:[%s4 + $0x8] sm:$0xff]
  %v226 = vld [vmem:[%s4 + $0x10] sm:$0xff]
  %v227 = vld [vmem:[%s4 + $0x18] sm:$0xff]
  %229 = vset.pattern.permute.xlu0 0
  %230 = vperm.xlu0 %229, %v224
  %v231 = vpop.permute.xlu0 %230
  %234 = vset.pattern.permute.xlu0 0
  %235 = vperm.xlu0 %234, %v225
  %v236 = vpop.permute.xlu0 %235
  %239 = vset.pattern.permute.xlu0 0
  %240 = vperm.xlu0 %239, %v226
  %v241 = vpop.permute.xlu0 %240
  %244 = vset.pattern.permute.xlu0 0
  %245 = vperm.xlu0 %244, %v227
  %v246 = vpop.permute.xlu0 %245
  %vm248 = vcmask 457728
  %v250 = vsel %vm248, %v220, 0
  %v253 = vsel %vm248, %v221, 0
  %v256 = vsel %vm248, %v222, 0
  %v259 = vsel %vm248, %v223, 0
  %261 = vmatprep.subr.mxu0 0.0
  %262 = vmatpush1.msra.mxu0 %v213
  %263 = vmatprep.subr.mxu0 0.0
  %264 = vmatpush1.msra.mxu0 %v214
  %265 = vmatprep.subr.mxu0 0.0
  %266 = vmatpush1.msra.mxu0 %v215
  %267 = vmatprep.subr.mxu0 0.0
  %268 = vmatpush1.msra.mxu0 %v216
  %269 = vmatprep.subr.mxu0 0.0
  %270 = vmatpush1.msra.mxu0 %v217
  %271 = vmatprep.subr.mxu0 0.0
  %272 = vmatpush1.msra.mxu0 %v218
  %273 = vmatprep.subr.mxu0 0.0
  %274 = vmatpush1.msra.mxu0 %v219
  %275 = vmatprep.subr.mxu0 0.0
  %276 = vmatpush1.msra.mxu0 0.0
  %277 = vmatprep.subr.mxu0 0.0
  %278 = vmatpush1.msra.mxu0 0.0
  %279 = vmatprep.subr.mxu0 0.0
  %280 = vmatpush1.msra.mxu0 0.0
  %281 = vmatprep.subr.mxu0 0.0
  %282 = vmatpush1.msra.mxu0 0.0
  %283 = vmatprep.subr.mxu0 0.0
  %284 = vmatpush1.msra.mxu0 0.0
  %285 = vmatprep.subr.mxu0 0.0
  %286 = vmatpush1.msra.mxu0 0.0
  %287 = vmatprep.subr.mxu0 0.0
  %288 = vmatpush1.msra.mxu0 0.0
  %289 = vmatprep.subr.mxu0 0.0
  %290 = vmatpush1.msra.mxu0 0.0
  %291 = vmatprep.subr.mxu0 0.0
  %292 = vmatpush1.msra.mxu0 0.0
  %293 = vmatprep.subr.mxu0 0.0
  %294 = vmatpush1.msra.mxu0 0.0
  %295 = vmatprep.subr.mxu0 0.0
  %296 = vmatpush1.msra.mxu0 0.0
  %297 = vmatprep.subr.mxu0 0.0
  %298 = vmatpush1.msra.mxu0 0.0
  %299 = vmatprep.subr.mxu0 0.0
  %300 = vmatpush1.msra.mxu0 0.0
  %301 = vmatprep.subr.mxu0 0.0
  %302 = vmatpush1.msra.mxu0 0.0
  %303 = vmatprep.subr.mxu0 0.0
  %304 = vmatpush1.msra.mxu0 0.0
  %305 = vmatprep.subr.mxu0 0.0
  %306 = vmatpush1.msra.mxu0 0.0
  %307 = vmatprep.subr.mxu0 0.0
  %308 = vmatpush1.msra.mxu0 0.0
  %309 = vmatprep.subr.mxu0 0.0
  %310 = vmatpush1.msra.mxu0 0.0
  %311 = vmatprep.subr.mxu0 0.0
  %312 = vmatpush1.msra.mxu0 0.0
  %313 = vmatprep.subr.mxu0 0.0
  %314 = vmatpush1.msra.mxu0 0.0
  %315 = vmatprep.subr.mxu0 0.0
  %316 = vmatpush1.msra.mxu0 0.0
  %317 = vmatprep.subr.mxu0 0.0
  %318 = vmatpush1.msra.mxu0 0.0
  %319 = vmatprep.subr.mxu0 0.0
  %320 = vmatpush1.msra.mxu0 0.0
  %321 = vmatprep.subr.mxu0 0.0
  %322 = vmatpush1.msra.mxu0 0.0
  %323 = vmatprep.subr.mxu0 0.0
  %324 = vmatpush1.msra.mxu0 0.0
  %325 = vmatprep.mubr.f32.mxu0 0.0
  %326 = vmatmul.mubr.f32.gmra.mrb[0].mxu0 %v250
  %v327 = vpop.f32.mrb[0].mxu0
  %v328 = vadd.f32 %v231, %v327
  %v329 = vpop.f32.mrb[0].mxu0
  %330 = vmatprep.mubr.f32.mxu0 0.0
  %331 = vmatmul.mubr.f32.gmra.mrb[0].mxu0 %v253
  %v332 = vpop.f32.mrb[0].mxu0
  %v333 = vadd.f32 %v236, %v332
  %v334 = vpop.f32.mrb[0].mxu0
  %335 = vmatprep.mubr.f32.mxu0 0.0
  %336 = vmatmul.mubr.f32.gmra.mrb[0].mxu0 %v256
  %v337 = vpop.f32.mrb[0].mxu0
  %v338 = vadd.f32 %v241, %v337
  %v339 = vpop.f32.mrb[0].mxu0
  %340 = vmatprep.mubr.f32.mxu0 0.0
  %341 = vmatmul.mubr.f32.gmra.mrb[0].mxu0 %v259
  %v342 = vpop.f32.mrb[0].mxu0
  %v343 = vadd.f32 %v246, %v342
  %v344 = vpop.f32.mrb[0].mxu0
  %345 = vdwg.mxu0
  %v346 = vmax.f32 %v328, 0.0
  %v347 = vmax.f32 %v333, 0.0
  %v348 = vmax.f32 %v338, 0.0
  %v349 = vmax.f32 %v343, 0.0
  %v350 = vld [vmem:[%s5] sm:$0x1]
  %v351 = vld [vmem:[#allocation6] sm:$0x1]
  %353 = vset.pattern.permute.xlu0 0
  %354 = vperm.xlu0 %353, %v351
  %v355 = vpop.permute.xlu0 %354
  %v357 = vlaneseq
  %v358 = vshrl.u32 %v357, 7
  %v359 = vsub.s32 0, %v358
  %v360 = vrot.slane %v355, %v359
  %vm361 = vcmask 261120
  %v363 = vsel %vm361, %v350, 0
  %365 = vmatprep.subr.mxu0 0.0
  %366 = vmatpush1.msra.mxu0 %v346
  %367 = vmatprep.subr.mxu0 0.0
  %368 = vmatpush1.msra.mxu0 %v347
  %369 = vmatprep.subr.mxu0 0.0
  %370 = vmatpush1.msra.mxu0 %v348
  %371 = vmatprep.subr.mxu0 0.0
  %372 = vmatpush1.msra.mxu0 %v349
  %373 = vmatprep.subr.mxu0 0.0
  %374 = vmatpush1.msra.mxu0 0.0
  %375 = vmatprep.subr.mxu0 0.0
  %376 = vmatpush1.msra.mxu0 0.0
  %377 = vmatprep.subr.mxu0 0.0
  %378 = vmatpush1.msra.mxu0 0.0
  %379 = vmatprep.subr.mxu0 0.0
  %380 = vmatpush1.msra.mxu0 0.0
  %381 = vmatprep.subr.mxu0 0.0
  %382 = vmatpush1.msra.mxu0 0.0
  %383 = vmatprep.subr.mxu0 0.0
  %384 = vmatpush1.msra.mxu0 0.0
  %385 = vmatprep.subr.mxu0 0.0
  %386 = vmatpush1.msra.mxu0 0.0
  %387 = vmatprep.subr.mxu0 0.0
  %388 = vmatpush1.msra.mxu0 0.0
  %389 = vmatprep.subr.mxu0 0.0
  %390 = vmatpush1.msra.mxu0 0.0
  %391 = vmatprep.subr.mxu0 0.0
  %392 = vmatpush1.msra.mxu0 0.0
  %393 = vmatprep.subr.mxu0 0.0
  %394 = vmatpush1.msra.mxu0 0.0
  %395 = vmatprep.subr.mxu0 0.0
  %396 = vmatpush1.msra.mxu0 0.0
  %397 = vmatprep.subr.mxu0 0.0
  %398 = vmatpush1.msra.mxu0 0.0
  %399 = vmatprep.subr.mxu0 0.0
  %400 = vmatpush1.msra.mxu0 0.0
  %401 = vmatprep.subr.mxu0 0.0
  %402 = vmatpush1.msra.mxu0 0.0
  %403 = vmatprep.subr.mxu0 0.0
  %404 = vmatpush1.msra.mxu0 0.0
  %405 = vmatprep.subr.mxu0 0.0
  %406 = vmatpush1.msra.mxu0 0.0
  %407 = vmatprep.subr.mxu0 0.0
  %408 = vmatpush1.msra.mxu0 0.0
  %409 = vmatprep.subr.mxu0 0.0
  %410 = vmatpush1.msra.mxu0 0.0
  %411 = vmatprep.subr.mxu0 0.0
  %412 = vmatpush1.msra.mxu0 0.0
  %413 = vmatprep.subr.mxu0 0.0
  %414 = vmatpush1.msra.mxu0 0.0
  %415 = vmatprep.subr.mxu0 0.0
  %416 = vmatpush1.msra.mxu0 0.0
  %417 = vmatprep.subr.mxu0 0.0
  %418 = vmatpush1.msra.mxu0 0.0
  %419 = vmatprep.subr.mxu0 0.0
  %420 = vmatpush1.msra.mxu0 0.0
  %421 = vmatprep.subr.mxu0 0.0
  %422 = vmatpush1.msra.mxu0 0.0
  %423 = vmatprep.subr.mxu0 0.0
  %424 = vmatpush1.msra.mxu0 0.0
  %425 = vmatprep.subr.mxu0 0.0
  %426 = vmatpush1.msra.mxu0 0.0
  %427 = vmatprep.subr.mxu0 0.0
  %428 = vmatpush1.msra.mxu0 0.0
  %429 = vmatprep.mubr.f32.mxu0 0.0
  %430 = vmatmul.mubr.f32.gmra.mrb[0].mxu0 %v363
  %v431 = vpop.f32.mrb[0].mxu0
  %v432 = vadd.f32 %v360, %v431
  %v433 = vpop.f32.mrb[0].mxu0
  %434 = vdwg.mxu0
  %vm435 = vcmp.lt.s32.totalorder %v48, 6
  %v436 = vld [vmem:[%s7] sm:$0x1]
  %v437 = vsub.f32 %v432, %v436
  %v438 = vsel %vm435, %v437, 0.0
  %v439 = vmul.f32 %v438, %v438
  %vm440 = vcmask 49152
  %v441 = vsel %vm440, %v439, 0.0
  %442 = vadd.xlane.f32.xlu0 %v441
  %v443 = vpop.xlane.xlu0 %442
  %v444 = vmul.f32 %v443, 0.16666667
  %vm445 = vcmp.eq.s32.totalorder %v48, 6
  %v446 = vsel %vm445, %v444, %v432
  %447 = vst.msk [vmem:[%s8] sm:$0x1] %vm440, %v446
  // Predicated region
  $region22: #{transformer_regression_forward.1} parent=0 // pred_check
    _
  $region23: #{transformer_regression_forward.1} parent=0 // pred_check_branch
    %449 = sbr.rel (0) target = $region25
  $region24: #{transformer_regression_forward.1} parent=0 // pred_region
    _
  $region25: #{transformer_regression_forward.1} parent=0 // pred_fallthru
    _
  // Predicated region
  $region26: #{transformer_regression_forward.1} parent=0 // pred_check
    _
  $region27: #{transformer_regression_forward.1} parent=0 // pred_check_branch
    %451 = sbr.rel (0) target = $region29
  $region28: #{transformer_regression_forward.1} parent=0 // pred_region
    _
  $region29: #{transformer_regression_forward.1} parent=0 // pred_fallthru
    _

</llo_original>
